<compile_context>
chip_gen: v6e
topology: v6e:2x2x1
jax: 0.10.0
libtpu: 0.0.40
codegen_flags: <defaults>
</compile_context>

<pallas_src>
import functools

import jax
import jax.numpy as jnp
from jax.experimental import pallas as pl
from jax.experimental.pallas import tpu as pltpu


def _gelu_new(x):
    # GPT-2 "gelu_new" (tanh approximation), matches HF ACT2FN["gelu_new"].
    c = jnp.sqrt(2.0 / jnp.pi).astype(x.dtype)
    return 0.5 * x * (1.0 + jnp.tanh(c * (x + 0.044715 * (x * x * x))))


def _mlp_kernel(x_ref, w_fc_ref, b_fc_ref, w_proj_ref, b_proj_ref, o_ref,
                *scratch, gelu_dtype, mm_dtype):
    # x_ref:      (tm, nx)       w_fc_ref:   (nx, tn)   b_fc_ref:   (1, tn) f32
    # w_proj_ref: (tn, nx)       b_proj_ref: (1, nx) f32
    # o_ref:      (tm, nx)       scratch:    optional (tm, nx) f32 accumulator
    # When out dtype is f32 the output block itself (resident across j) is
    # used as the accumulator and no scratch is allocated.
    acc_ref = scratch[0] if scratch else o_ref
    j = pl.program_id(1)

    @pl.when(j == 0)
    def _init():
        # Fold the projection bias into the accumulator init
        # (saves a full [tm, nx] VALU pass in the epilogue).
        acc_ref[...] = jnp.broadcast_to(b_proj_ref[...],
                                        acc_ref.shape).astype(acc_ref.dtype)

    h = jnp.dot(x_ref[...], w_fc_ref[...], preferred_element_type=jnp.float32)
    h = h + b_fc_ref[...]                       # bias add in f32
    h = _gelu_new(h.astype(gelu_dtype))         # bf16 gelu only on v6e/v7x
    h = h.astype(mm_dtype)                      # MXU-native LHS for matmul 2
    acc_ref[...] += jnp.dot(h, w_proj_ref[...], preferred_element_type=jnp.float32)

    if scratch:
        @pl.when(j == pl.num_programs(1) - 1)
        def _finalize():
            o_ref[...] = acc_ref[...].astype(o_ref.dtype)


def _round_up(x, m):
    return (x + m - 1) // m * m


def _vmem_bytes(tm, tn, nx, cbytes, obytes, resident, use_acc):
    """Estimate of scoped VMEM used by one pallas_call step (incl. buffering)."""
    wbufs = 1 if resident else 2
    return (
        wbufs * 2 * nx * tn * cbytes        # w_fc / w_proj chunks
        + wbufs * tn * 4 + nx * 4           # biases (f32)
        + 2 * tm * nx * cbytes              # x tile, double-buffered
        + 2 * tm * nx * obytes              # out tile, double-buffered
        + (tm * nx * 4 if use_acc else 0)   # f32 accumulator scratch
        + 2 * tm * tn * 4                   # f32 h intermediate + cast copy
    )


def _tn_candidates(n_state):
    """Multiples of 128 that evenly divide n_state (descending), for streaming."""
    return [d for d in range(n_state - 128, 0, -128) if n_state % d == 0]


def _select_tiles(M, nx, n_state, cbytes, obytes, budget, use_acc):
    """Jointly pick (tm, tn, n_state_pad, resident) under a VMEM budget."""
    m_al = _round_up(max(M, 1), 8)
    # Megacore: aim for >=2 row tiles (v7x has 2 TCs) unless M itself is tiny.
    tm_cap = 8 if m_al <= 8 else max(8, _round_up((m_al + 1) // 2, 8))
    tm_ladder = [t for t in (1024, 768, 512, 384, 256, 128, 64, 32, 16, 8)
                 if t <= tm_cap] or [tm_cap]

    # 1) Weight-resident (tn == n_state): weights read from HBM exactly once.
    #    Cap tm at 512 (larger only grows the f32 h intermediate).
    resident_tm = None
    for tm in (t for t in tm_ladder if t <= 512):
        if _vmem_bytes(tm, n_state, nx, cbytes, obytes, True, use_acc) <= budget:
            resident_tm = tm
            break
    if resident_tm is not None and resident_tm >= min(256, tm_cap):
        return resident_tm, n_state, n_state, True

    # 2) Streamed weights: maximize tm first (arithmetic intensity vs. HBM is
    #    ~2*tm flops per weight byte), then the largest tn that still fits.
    n_state_pad = n_state
    tn_cands = _tn_candidates(n_state)
    if not tn_cands:
        # No clean multiple-of-128 divisor: zero-pad the hidden dim (safe:
        # gelu_new(0) == 0 and padded w_proj rows are zero).
        n_state_pad = _round_up(n_state, 512)
        tn_cands = [d for d in (512, 256, 128) if n_state_pad % d == 0]
    for tm in tm_ladder:
        for tn in tn_cands:
            if _vmem_bytes(tm, tn, nx, cbytes, obytes, False, use_acc) <= budget:
                if resident_tm is not None and resident_tm >= tm:
                    return resident_tm, n_state, n_state, True
                return tm, tn, n_state_pad, False
    if resident_tm is not None:
        return resident_tm, n_state, n_state, True
    return tm_ladder[-1], tn_cands[-1], n_state_pad, False


@functools.partial(jax.jit, static_argnames=("tm", "tn_ff", "compute_dtype"))
def mlp_forward(x, w_fc, b_fc, w_proj, b_proj, *, tm=None, tn_ff=None,
                compute_dtype=None):
    """GPT-2 MLP forward.  x: [B, T, n_embd] -> [B, T, n_embd].

    For best performance pass w_fc / w_proj already cast to `compute_dtype`
    (e.g. bf16) at model load; the in-wrapper casts are then no-ops.
    """
    B, T, nx = x.shape
    n_state = w_fc.shape[1]
    M = B * T

    out_dtype = x.dtype
    cdt = jnp.dtype(compute_dtype) if compute_dtype is not None else jnp.dtype(x.dtype)
    cbytes = cdt.itemsize
    obytes = jnp.dtype(out_dtype).itemsize
    # f32 output -> accumulate directly into the (reduction-resident) out block.
    use_acc = jnp.dtype(out_dtype) != jnp.dtype(jnp.float32)

    # --- trace-time device queries (static Python values) ---
    try:
        vmem_cap = int(pltpu.get_tpu_info().vmem_capacity_bytes)
    except Exception:
        vmem_cap = 64 << 20                 # conservative (v7x per-TC)
    try:
        kind = jax.devices()[0].device_kind.lower()
    except Exception:
        kind = ""
    bf16_vpu = not any(s in kind for s in ("v2", "v3", "v4", "v5"))
    gelu_dtype = cdt if (bf16_vpu and cdt == jnp.dtype(jnp.bfloat16)) else jnp.dtype(jnp.float32)

    # --- VMEM-budgeted joint tile selection ---
    budget = int(vmem_cap * 0.7)
    tm_eff, tn_eff, n_state_pad, resident = _select_tiles(
        M, nx, n_state, cbytes, obytes, budget, use_acc)
    if tm is not None:
        tm_eff = _round_up(min(tm, _round_up(M, 8)), 8)
    if tn_ff is not None:
        assert n_state % tn_ff == 0, "tn_ff must divide n_state"
        tn_eff, n_state_pad, resident = tn_ff, n_state, tn_ff == n_state
    m_pad = _round_up(M, tm_eff)

    # --- explicit scoped-VMEM budget, clamped to the device capacity ---
    vmem_est = _vmem_bytes(tm_eff, tn_eff, nx, cbytes, obytes, resident, use_acc)
    vmem_limit = int(min(max(32 << 20, int(vmem_est * 1.5) + (4 << 20)),
                         int(vmem_cap * 0.9)))

    # Invariant blocks (constant index_map) only need a single VMEM buffer.
    const_mode = pl.Buffered(1)
    w_mode = const_mode if resident else None   # stream -> default double-buffer

    # --- operand prep (no-op casts if caller pre-cast; accumulation stays f32) ---
    x2 = x.reshape(M, nx)
    if m_pad != M:
        x2 = jnp.pad(x2, ((0, m_pad - M), (0, 0)))
    x2 = x2.astype(cdt)
    w_fc_c = w_fc.astype(cdt)
    w_proj_c = w_proj.astype(cdt)
    b_fc2 = b_fc.reshape(1, n_state).astype(jnp.float32)
    b_proj2 = b_proj.reshape(1, nx).astype(jnp.float32)
    if n_state_pad != n_state:
        dp = n_state_pad - n_state
        w_fc_c = jnp.pad(w_fc_c, ((0, 0), (0, dp)))
        b_fc2 = jnp.pad(b_fc2, ((0, 0), (0, dp)))
        w_proj_c = jnp.pad(w_proj_c, ((0, dp), (0, 0)))

    scratch_shapes = [pltpu.VMEM((tm_eff, nx), jnp.float32)] if use_acc else []
    kernel = functools.partial(_mlp_kernel, gelu_dtype=gelu_dtype, mm_dtype=cdt)

    out2 = pl.pallas_call(
        kernel,
        out_shape=jax.ShapeDtypeStruct((m_pad, nx), out_dtype),
        grid_spec=pltpu.PrefetchScalarGridSpec(
            num_scalar_prefetch=0,
            grid=(m_pad // tm_eff, n_state_pad // tn_eff),
            in_specs=[
                pl.BlockSpec((tm_eff, nx), lambda i, j: (i, 0)),          # x tile
                pl.BlockSpec((nx, tn_eff), lambda i, j: (0, j),
                             pipeline_mode=w_mode),                       # w_fc
                pl.BlockSpec((1, tn_eff), lambda i, j: (0, j),
                             pipeline_mode=w_mode),                       # b_fc
                pl.BlockSpec((tn_eff, nx), lambda i, j: (j, 0),
                             pipeline_mode=w_mode),                       # w_proj
                pl.BlockSpec((1, nx), lambda i, j: (0, 0),
                             pipeline_mode=const_mode),                   # b_proj
            ],
            out_specs=pl.BlockSpec((tm_eff, nx), lambda i, j: (i, 0)),
            scratch_shapes=scratch_shapes,
        ),
        compiler_params=pltpu.CompilerParams(
            dimension_semantics=("parallel", "arbitrary"),
            vmem_limit_bytes=vmem_limit,
        ),
    )(x2, w_fc_c, b_fc2, w_proj_c, b_proj2)

    return out2[:M].reshape(B, T, nx)


def mlp_reference(x, w_fc, b_fc, w_proj, b_proj):
    xf = x.astype(jnp.float32)
    h = _gelu_new(xf @ w_fc.astype(jnp.float32) + b_fc.astype(jnp.float32))
    return h @ w_proj.astype(jnp.float32) + b_proj.astype(jnp.float32)


if __name__ == "__main__":
    # Small GPT-2-style config with lane-dense feature dims:
    #   n_embd=128, n_state=4*n_embd=512, batch=2, seq=64.
    B, T, n_embd = 2, 64, 128
    n_state = 4 * n_embd

    key = jax.random.PRNGKey(0)
    kx, kfc, kproj = jax.random.split(key, 3)

    x = jax.random.normal(kx, (B, T, n_embd), dtype=jnp.float32)
    # Conv1D init: weight ~ N(0, 0.02), bias = 0 (weight stored [nx, nf]).
    w_fc = 0.02 * jax.random.normal(kfc, (n_embd, n_state), dtype=jnp.float32)
    b_fc = jnp.zeros((n_state,), dtype=jnp.float32)
    w_proj = 0.02 * jax.random.normal(kproj, (n_state, n_embd), dtype=jnp.float32)
    b_proj = jnp.zeros((n_embd,), dtype=jnp.float32)

    # 1) f32 path (exact eval-mode semantics; accumulates directly into output).
    out = jax.block_until_ready(mlp_forward(x, w_fc, b_fc, w_proj, b_proj))
    ref = mlp_reference(x, w_fc, b_fc, w_proj, b_proj)
    assert out.shape == (B, T, n_embd)
    assert jnp.allclose(out, ref, atol=1e-4, rtol=1e-4), "f32 mismatch vs reference"

    # 2) bf16 operands (MXU-native on v6e/v7x), f32 accumulation.
    #    Weights cast ONCE here ("at model load"), not per forward call.
    xb, wfb, wpb = (a.astype(jnp.bfloat16) for a in (x, w_fc, w_proj))
    out_bf = jax.block_until_ready(mlp_forward(xb, wfb, b_fc, wpb, b_proj))
    ref_bf = mlp_reference(xb, wfb, b_fc, wpb, b_proj)
    assert out_bf.dtype == jnp.bfloat16
    assert jnp.allclose(out_bf.astype(jnp.float32), ref_bf,
                        atol=2e-2, rtol=5e-2), "bf16 mismatch vs reference"

    # 3) ragged row count (exercises the small-M / pad-to-tile path, e.g. decode).
    xr = x[:1, :5]
    out_r = jax.block_until_ready(mlp_forward(xr, w_fc, b_fc, w_proj, b_proj))
    ref_r = mlp_reference(xr, w_fc, b_fc, w_proj, b_proj)
    assert jnp.allclose(out_r, ref_r, atol=1e-4, rtol=1e-4), "ragged mismatch"

    print("KERNEL_OK")
</pallas_src>

<mosaic_0001>
module attributes {stable_mosaic.version = 11 : i64} {
  func.func @_mlp_kernel(%arg0: i32, %arg1: i32, %arg2: memref<64x128xf32, #tpu.memory_space<vmem>>, %arg3: memref<128x512xf32, #tpu.memory_space<vmem>>, %arg4: memref<1x512xf32, #tpu.memory_space<vmem>>, %arg5: memref<512x128xf32, #tpu.memory_space<vmem>>, %arg6: memref<1x128xf32, #tpu.memory_space<vmem>>, %arg7: memref<64x128xf32, #tpu.memory_space<vmem>>) attributes {dimension_semantics = [#tpu.dimension_semantics<parallel>, #tpu.dimension_semantics<arbitrary>], iteration_bounds = array<i64: 2, 1>, scalar_prefetch = 0 : i64, scratch_operands = 0 : i64, tpu.core_type = #tpu.core_type<tc>, window_params = [{transform_indices = @transform_0, window_bounds = array<i64: 64, 128>}, {pipeline_mode = #tpu.pipeline_mode<synchronous>, transform_indices = @transform_1, window_bounds = array<i64: 128, 512>}, {pipeline_mode = #tpu.pipeline_mode<synchronous>, transform_indices = @transform_2, window_bounds = array<i64: 1, 512>}, {pipeline_mode = #tpu.pipeline_mode<synchronous>, transform_indices = @transform_3, window_bounds = array<i64: 512, 128>}, {pipeline_mode = #tpu.pipeline_mode<synchronous>, transform_indices = @transform_4, window_bounds = array<i64: 1, 128>}, {transform_indices = @transform_5, window_bounds = array<i64: 64, 128>}]} {
    %c0_i32 = arith.constant 0 : i32
    %0 = arith.cmpi eq, %arg1, %c0_i32 : i32
    %1 = arith.extui %0 : i1 to i32
    %c0_i32_0 = arith.constant 0 : i32
    %2 = arith.cmpi ne, %1, %c0_i32_0 : i32
    scf.if %2 {
      %c0_17 = arith.constant 0 : index
      %c0_18 = arith.constant 0 : index
      %28 = vector.load %arg6[%c0_17, %c0_18] : memref<1x128xf32, #tpu.memory_space<vmem>>, vector<1x128xf32>
      %29 = vector.shape_cast %28 : vector<1x128xf32> to vector<1x128xf32>
      %30 = vector.broadcast %29 : vector<1x128xf32> to vector<64x128xf32>
      %c0_19 = arith.constant 0 : index
      %c0_20 = arith.constant 0 : index
      %31 = vector.load %arg7[%c0_19, %c0_20] : memref<64x128xf32, #tpu.memory_space<vmem>>, vector<64x128xf32>
      tpu.vector_store %arg7[%c0_19, %c0_20], %30 {strides = array<i32>} : memref<64x128xf32, #tpu.memory_space<vmem>>, vector<64x128xf32>,
    } else {
    }
    %c0 = arith.constant 0 : index
    %c0_1 = arith.constant 0 : index
    %3 = vector.load %arg2[%c0, %c0_1] : memref<64x128xf32, #tpu.memory_space<vmem>>, vector<64x128xf32>
    %c0_2 = arith.constant 0 : index
    %c0_3 = arith.constant 0 : index
    %4 = vector.load %arg3[%c0_2, %c0_3] : memref<128x512xf32, #tpu.memory_space<vmem>>, vector<128x512xf32>
    %cst = arith.constant dense<0.000000e+00> : vector<64x512xf32>
    %5 = tpu.matmul %3, %4, %cst {dimension_numbers = #tpu.dot_dimension_numbers<[1], [0], [0], [1], [0, 0, 1, 1], [], []>} : vector<64x128xf32>, vector<128x512xf32>, vector<64x512xf32> -> vector<64x512xf32>
    %c0_4 = arith.constant 0 : index
    %c0_5 = arith.constant 0 : index
    %6 = vector.load %arg4[%c0_4, %c0_5] : memref<1x512xf32, #tpu.memory_space<vmem>>, vector<1x512xf32>
    %7 = vector.broadcast %6 : vector<1x512xf32> to vector<64x512xf32>
    %8 = arith.addf %5, %7 : vector<64x512xf32>
    %cst_6 = arith.constant 0.636619746 : f32
    %9 = math.sqrt %cst_6 : f32
    %cst_7 = arith.constant 5.000000e-01 : f32
    %10 = vector.broadcast %cst_7 : f32 to vector<64x512xf32>
    %11 = arith.mulf %10, %8 : vector<64x512xf32>
    %12 = arith.mulf %8, %8 : vector<64x512xf32>
    %13 = arith.mulf %12, %8 : vector<64x512xf32>
    %cst_8 = arith.constant 4.471500e-02 : f32
    %14 = vector.broadcast %cst_8 : f32 to vector<64x512xf32>
    %15 = arith.mulf %14, %13 : vector<64x512xf32>
    %16 = arith.addf %8, %15 : vector<64x512xf32>
    %17 = vector.broadcast %9 : f32 to vector<64x512xf32>
    %18 = arith.mulf %17, %16 : vector<64x512xf32>
    %19 = math.tanh %18 : vector<64x512xf32>
    %cst_9 = arith.constant 1.000000e+00 : f32
    %20 = vector.broadcast %cst_9 : f32 to vector<64x512xf32>
    %21 = arith.addf %20, %19 : vector<64x512xf32>
    %22 = arith.mulf %11, %21 : vector<64x512xf32>
    %c0_10 = arith.constant 0 : index
    %c0_11 = arith.constant 0 : index
    %23 = vector.load %arg7[%c0_10, %c0_11] : memref<64x128xf32, #tpu.memory_space<vmem>>, vector<64x128xf32>
    %c0_12 = arith.constant 0 : index
    %c0_13 = arith.constant 0 : index
    %24 = vector.load %arg5[%c0_12, %c0_13] : memref<512x128xf32, #tpu.memory_space<vmem>>, vector<512x128xf32>
    %cst_14 = arith.constant dense<0.000000e+00> : vector<64x128xf32>
    %25 = tpu.matmul %22, %24, %cst_14 {dimension_numbers = #tpu.dot_dimension_numbers<[1], [0], [0], [1], [0, 0, 1, 1], [], []>} : vector<64x512xf32>, vector<512x128xf32>, vector<64x128xf32> -> vector<64x128xf32>
    %26 = arith.addf %23, %25 : vector<64x128xf32>
    %c0_15 = arith.constant 0 : index
    %c0_16 = arith.constant 0 : index
    %27 = vector.load %arg7[%c0_15, %c0_16] : memref<64x128xf32, #tpu.memory_space<vmem>>, vector<64x128xf32>
    tpu.vector_store %arg7[%c0_15, %c0_16], %26 {strides = array<i32>} : memref<64x128xf32, #tpu.memory_space<vmem>>, vector<64x128xf32>,
    return
  }
  func.func @transform_0(%arg0: i32, %arg1: i32) -> (i32, i32) {
    %c0_i32 = arith.constant 0 : i32
    %c0_i32_0 = arith.constant 0 : i32
    return %arg0, %c0_i32 : i32, i32
  }
  func.func @transform_1(%arg0: i32, %arg1: i32) -> (i32, i32) {
    %c0_i32 = arith.constant 0 : i32
    %c0_i32_0 = arith.constant 0 : i32
    return %c0_i32, %arg1 : i32, i32
  }
  func.func @transform_2(%arg0: i32, %arg1: i32) -> (i32, i32) {
    %c0_i32 = arith.constant 0 : i32
    %c0_i32_0 = arith.constant 0 : i32
    return %c0_i32, %arg1 : i32, i32
  }
  func.func @transform_3(%arg0: i32, %arg1: i32) -> (i32, i32) {
    %c0_i32 = arith.constant 0 : i32
    %c0_i32_0 = arith.constant 0 : i32
    return %arg1, %c0_i32 : i32, i32
  }
  func.func @transform_4(%arg0: i32, %arg1: i32) -> (i32, i32) {
    %c0_i32 = arith.constant 0 : i32
    %c0_i32_0 = arith.constant 0 : i32
    %c0_i32_1 = arith.constant 0 : i32
    return %c0_i32, %c0_i32_0 : i32, i32
  }
  func.func @transform_5(%arg0: i32, %arg1: i32) -> (i32, i32) {
    %c0_i32 = arith.constant 0 : i32
    %c0_i32_0 = arith.constant 0 : i32
    return %arg0, %c0_i32 : i32, i32
  }
}

</mosaic_0001>

<llo_original>
// kernel: mlp_forward.1
$region0: #{mlp_forward.1}
  #allocation0 [shape = 'u32[]', space=smem, size = 0x4, offset = 0x4, fixed_abs, tag = 'smem constant byte address 0x4 - core index']
  #allocation1 [shape = 'u32[144,128]{1,0:T(1,128)}', space=vmem, size = 0x12000, scoped, tag = 'internal scratch']
  %s0 = inlined_call_operand.hbm [shape: f32[128,128], index: 0, kind: input, shape index: {}]
  %s1 = inlined_call_operand.hbm [shape: f32[128,512], index: 1, kind: input, shape index: {}]
  %s2 = inlined_call_operand.vmem [shape: f32[1,512], index: 2, kind: input, shape index: {}]
  %s3 = inlined_call_operand.hbm [shape: f32[512,128], index: 3, kind: input, shape index: {}]
  %s4 = inlined_call_operand.vmem [shape: f32[1,128], index: 4, kind: input, shape index: {}]
  %s5 = inlined_call_operand.hbm [shape: f32[128,128], index: 5, kind: output, shape index: {}]
  %s6 = sld [smem:[#allocation0]]
  $region69: #{mlp_forward.1} parent=0
    _
  %s8 = ssub.s32 1, %s6
  %s9 = scalar_select 0, %s8, %s6
  $region1: #{mlp_forward.1} parent=0
    #allocation2 [shape = 'u8[65536]{0}', space=vmem, size = 0x10000, scoped, tag = 'input window, operand 0']
    #allocation3 [shape = 's32[2]{0}', space=sflag, size = 0x8, scoped, tag = 'scoped memory for mlp_forward.1']
    #allocation4 [shape = 's32[2]{0}', space=sflag, size = 0x8, scoped, tag = 'scoped memory for mlp_forward.1']
    #allocation5 [shape = 'u8[262144]{0}', space=vmem, size = 0x40000, scoped, tag = 'input window, operand 1, single buffered']
    #allocation6 [shape = 's32[1]{0}', space=sflag, size = 0x4, scoped, tag = 'scoped memory for mlp_forward.1']
    #allocation7 [shape = 'u8[262144]{0}', space=vmem, size = 0x40000, scoped, tag = 'input window, operand 3, single buffered']
    #allocation8 [shape = 'u8[65536]{0}', space=vmem, size = 0x10000, scoped, tag = 'output window, operand 0']
    %10 = vsyncpa [#allocation3], 0
    %s11 = scalar_lea.sflag [#allocation3], 1
    %12 = vsyncpa %s11, 0
    %13 = vsyncpa [#allocation6], 0
    %14 = vsyncpa [#allocation4], 0
    %s15 = scalar_lea.sflag [#allocation4], 1
    %16 = vsyncpa %s15, 0
    loop: start=0, step=1, limit=4
    $region2: #{mlp_forward.1} parent=1 // loop_pre_header
      _
    $region3: #{mlp_forward.1} parent=1 // loop_header
      %s18 = sphi 0, %s22
      %p19 = scmp.ge.s32.totalorder %s18, 4
      %s25 = sphi 0, %s37
      %s26 = sphi 0, %s33
      %s27 = sphi 0, %s25
      %s28 = sphi 0, %s26
      %s29 = sphi 0, %s27
      %s30 = sphi 0, %s28
      %s40 = sphi 0, %s42
      %s43 = sphi 0, %s40
      %s44 = sphi 0, %s43
      %s60 = sphi 0, %s44
      %s66 = sphi 0, %s68
      %s69 = sphi 0, %s66
      %s70 = sphi 0, %s69
      %s86 = sphi 0, %s70
      %s92 = sphi 0, %s94
      %s95 = sphi 0, %s92
      %s96 = sphi 0, %s95
      %s112 = sphi 0, %s96
      %s118 = sphi 0, %s120
      %s121 = sphi 0, %s118
      %s122 = sphi 0, %s121
      %s138 = sphi 0, %s122
      %s142 = sphi 0, %s142
      %s144 = sphi 0, %s142
      %s145 = sphi 0, %s144
      %s159 = sphi 0, %s145
      %s165 = sphi 0, %s167
      %s168 = sphi 0, %s165
      %s169 = sphi 0, %s168
      %s185 = sphi 0, %s169
    $region4: #{mlp_forward.1} parent=1 // loop_header_branch
      %21 = sbr.rel (%p19) target = $region8
    $region5: #{mlp_forward.1} parent=1 // loop_body
      %s23 = ssub.s32 %s18, 1
      %s24 = ssub.s32 %s18, 2
      %s31 = sadd.s32 1, %s26
      %p32 = scmp.ge.s32.totalorder %s31, 1
      %s33 = scalar_select %p32, 0, %s31
      %s34 = sadd.s32 1, %s25
      %s35 = scalar_select %p32, %s34, %s25
      %p36 = scmp.ge.s32.totalorder %s35, 2
      %s37 = scalar_select %p36, 0, %s35
      %s38 = ssub.s32 %s25, %s37
      %p39 = scmp.eq.s32.totalorder %s38, 0
      %s41 = sadd.s32 %s40, 1
      %s42 = scalar_select %p39, %s40, %s41
      %p45 = pneg %p39
      %p46 = scmp.eq.s32.totalorder %s18, 1
      %p47 = por %p45, %p46
      %p48 = scmp.ne.s32.totalorder %s40, %s43
      %p49 = scmp.eq.s32.totalorder %s18, 0
      %p50 = por %p48, %p49
      %p51 = scmp.ne.s32.totalorder %s40, %s43
      %p52 = scmp.eq.s32.totalorder %s23, 1
      %p53 = por %p51, %p52
      %p54 = scmp.ne.s32.totalorder %s43, %s44
      %p55 = scmp.eq.s32.totalorder %s23, 0
      %p56 = por %p54, %p55
      %p57 = scmp.ne.s32.totalorder %s43, %s44
      %p58 = scmp.eq.s32.totalorder %s24, 1
      %p59 = por %p57, %p58
      %p61 = scmp.ne.s32.totalorder %s44, %s60
      %p62 = scmp.eq.s32.totalorder %s24, 0
      %p63 = por %p61, %p62
      %s64 = ssub.s32 %s26, %s33
      %p65 = scmp.eq.s32.totalorder %s64, 0
      %s67 = sadd.s32 %s66, 1
      %s68 = scalar_select %p65, %s66, %s67
      %p71 = pneg %p65
      %p72 = scmp.eq.s32.totalorder %s18, 1
      %p73 = por %p71, %p72
      %p74 = scmp.ne.s32.totalorder %s66, %s69
      %p75 = scmp.eq.s32.totalorder %s18, 0
      %p76 = por %p74, %p75
      %p77 = scmp.ne.s32.totalorder %s66, %s69
      %p78 = scmp.eq.s32.totalorder %s23, 1
      %p79 = por %p77, %p78
      %p80 = scmp.ne.s32.totalorder %s69, %s70
      %p81 = scmp.eq.s32.totalorder %s23, 0
      %p82 = por %p80, %p81
      %p83 = scmp.ne.s32.totalorder %s69, %s70
      %p84 = scmp.eq.s32.totalorder %s24, 1
      %p85 = por %p83, %p84
      %p87 = scmp.ne.s32.totalorder %s70, %s86
      %p88 = scmp.eq.s32.totalorder %s24, 0
      %p89 = por %p87, %p88
      %s90 = ssub.s32 %s26, %s33
      %p91 = scmp.eq.s32.totalorder %s90, 0
      %s93 = sadd.s32 %s92, 1
      %s94 = scalar_select %p91, %s92, %s93
      %p97 = pneg %p91
      %p98 = scmp.eq.s32.totalorder %s18, 1
      %p99 = por %p97, %p98
      %p100 = scmp.ne.s32.totalorder %s92, %s95
      %p101 = scmp.eq.s32.totalorder %s18, 0
      %p102 = por %p100, %p101
      %p103 = scmp.ne.s32.totalorder %s92, %s95
      %p104 = scmp.eq.s32.totalorder %s23, 1
      %p105 = por %p103, %p104
      %p106 = scmp.ne.s32.totalorder %s95, %s96
      %p107 = scmp.eq.s32.totalorder %s23, 0
      %p108 = por %p106, %p107
      %p109 = scmp.ne.s32.totalorder %s95, %s96
      %p110 = scmp.eq.s32.totalorder %s24, 1
      %p111 = por %p109, %p110
      %p113 = scmp.ne.s32.totalorder %s96, %s112
      %p114 = scmp.eq.s32.totalorder %s24, 0
      %p115 = por %p113, %p114
      %s116 = ssub.s32 %s26, %s33
      %p117 = scmp.eq.s32.totalorder %s116, 0
      %s119 = sadd.s32 %s118, 1
      %s120 = scalar_select %p117, %s118, %s119
      %p123 = pneg %p117
      %p124 = scmp.eq.s32.totalorder %s18, 1
      %p125 = por %p123, %p124
      %p126 = scmp.ne.s32.totalorder %s118, %s121
      %p127 = scmp.eq.s32.totalorder %s18, 0
      %p128 = por %p126, %p127
      %p129 = scmp.ne.s32.totalorder %s118, %s121
      %p130 = scmp.eq.s32.totalorder %s23, 1
      %p131 = por %p129, %p130
      %p132 = scmp.ne.s32.totalorder %s121, %s122
      %p133 = scmp.eq.s32.totalorder %s23, 0
      %p134 = por %p132, %p133
      %p135 = scmp.ne.s32.totalorder %s121, %s122
      %p136 = scmp.eq.s32.totalorder %s24, 1
      %p137 = por %p135, %p136
      %p139 = scmp.ne.s32.totalorder %s122, %s138
      %p140 = scmp.eq.s32.totalorder %s24, 0
      %p141 = por %p139, %p140
      %s143 = sadd.s32 %s142, 1
      %p146 = scmp.eq.s32.totalorder %s18, 1
      %p147 = scmp.ne.s32.totalorder %s142, %s144
      %p148 = scmp.eq.s32.totalorder %s18, 0
      %p149 = por %p147, %p148
      %p150 = scmp.ne.s32.totalorder %s142, %s144
      %p151 = scmp.eq.s32.totalorder %s23, 1
      %p152 = por %p150, %p151
      %p153 = scmp.ne.s32.totalorder %s144, %s145
      %p154 = scmp.eq.s32.totalorder %s23, 0
      %p155 = por %p153, %p154
      %p156 = scmp.ne.s32.totalorder %s144, %s145
      %p157 = scmp.eq.s32.totalorder %s24, 1
      %p158 = por %p156, %p157
      %p160 = scmp.ne.s32.totalorder %s145, %s159
      %p161 = scmp.eq.s32.totalorder %s24, 0
      %p162 = por %p160, %p161
      %s163 = ssub.s32 %s25, %s37
      %p164 = scmp.eq.s32.totalorder %s163, 0
      %s166 = sadd.s32 %s165, 1
      %s167 = scalar_select %p164, %s165, %s166
      %p170 = pneg %p164
      %p171 = scmp.eq.s32.totalorder %s18, 1
      %p172 = por %p170, %p171
      %p173 = scmp.ne.s32.totalorder %s165, %s168
      %p174 = scmp.eq.s32.totalorder %s18, 0
      %p175 = por %p173, %p174
      %p176 = scmp.ne.s32.totalorder %s165, %s168
      %p177 = scmp.eq.s32.totalorder %s23, 1
      %p178 = por %p176, %p177
      %p179 = scmp.ne.s32.totalorder %s168, %s169
      %p180 = scmp.eq.s32.totalorder %s23, 0
      %p181 = por %p179, %p180
      %p182 = scmp.ne.s32.totalorder %s168, %s169
      %p183 = scmp.eq.s32.totalorder %s24, 1
      %p184 = por %p182, %p183
      %p186 = scmp.ne.s32.totalorder %s169, %s185
      %p187 = scmp.eq.s32.totalorder %s24, 0
      %p188 = por %p186, %p187
      %p189 = scmp.le.s32.totalorder 1, %s18
      %p190 = scmp.lt.s32.totalorder %s18, 3
      %p191 = pnand %p189, %p190
      %p192 = pneg %p191
      // Predicated region
      $region9: #{mlp_forward.1} parent=5 // pred_check
        _
      $region10: #{mlp_forward.1} parent=5 // pred_check_branch
        %194 = sbr.rel (%p191) target = $region12
      $region11: #{mlp_forward.1} parent=5 // pred_region
        %s195 = ssub.s32 %s18, 1
        // Predicated region
        $region13: #{mlp_forward.1} parent=11 // pred_check
          %p196 = pneg %p82
        $region14: #{mlp_forward.1} parent=11 // pred_check_branch
          %198 = sbr.rel (%p196) target = $region16
        $region15: #{mlp_forward.1} parent=11 // pred_region
          %s199 = smul.u32 4, %s28
          %s201 = ssub.s32 8192, 8192
          %202 = vsyncadd [#allocation6], %s201
          %s203 = smul.addr %s199, 128
          %s204 = scalar_lea.hbm %s1, %s203
          %s205 = sshll.u32 [#allocation5], 4
          %s206 = int_to_ptr.vmem [resolvable:$true] %s205
          %211 = dma.hbm_to_vmem [thread:$0]  %s204, 8192, %s206, [#allocation6], 512, 512, 32
        $region16: #{mlp_forward.1} parent=11 // pred_fallthru
          _
        // Predicated region
        $region17: #{mlp_forward.1} parent=11 // pred_check
          %p212 = pneg %p108
        $region18: #{mlp_forward.1} parent=11 // pred_check_branch
          %214 = sbr.rel (%p212) target = $region20
        $region19: #{mlp_forward.1} parent=11 // pred_region
          %s215 = smul.u32 4, %s28
          %p216 = scmp.lt.s32.totalorder %s215, 3
          %s217 = scalar_select %p216, %s215, 3
          %s218 = scalar_lea.vmem %s2, %s217
          %s219 = smul.u32 4, %s28
        $region20: #{mlp_forward.1} parent=11 // pred_fallthru
          _
        // Predicated region
        $region21: #{mlp_forward.1} parent=11 // pred_check
          %p220 = pneg %p134
        $region22: #{mlp_forward.1} parent=11 // pred_check_branch
          %222 = sbr.rel (%p220) target = $region24
        $region23: #{mlp_forward.1} parent=11 // pred_region
          %s223 = smul.u32 64, %s28
          %s225 = ssub.s32 8192, 8192
          %226 = vsyncadd [#allocation6], %s225
          %s227 = smul.addr %s223, 128
          %s228 = scalar_lea.hbm %s3, %s227
          %s229 = sshll.u32 [#allocation7], 4
          %s230 = int_to_ptr.vmem [resolvable:$true] %s229
          %235 = dma.hbm_to_vmem [thread:$0]  %s228, 8192, %s230, [#allocation6], 128, 128, 8
        $region24: #{mlp_forward.1} parent=11 // pred_fallthru
          _
        // Predicated region
        $region25: #{mlp_forward.1} parent=11 // pred_check
          %p236 = pneg %p155
        $region26: #{mlp_forward.1} parent=11 // pred_check_branch
          %238 = sbr.rel (%p236) target = $region28
        $region27: #{mlp_forward.1} parent=11 // pred_region
          _
        $region28: #{mlp_forward.1} parent=11 // pred_fallthru
          _
      $region12: #{mlp_forward.1} parent=5 // pred_fallthru
        _
      %p239 = scmp.lt.s32.totalorder %s18, 2
      // Predicated region
      $region29: #{mlp_forward.1} parent=5 // pred_check
        %p240 = pneg %p239
      $region30: #{mlp_forward.1} parent=5 // pred_check_branch
        %242 = sbr.rel (%p240) target = $region32
      $region31: #{mlp_forward.1} parent=5 // pred_region
        // Predicated region
        $region33: #{mlp_forward.1} parent=31 // pred_check
          %p243 = pneg %p50
        $region34: #{mlp_forward.1} parent=31 // pred_check_branch
          %245 = sbr.rel (%p243) target = $region36
        $region35: #{mlp_forward.1} parent=31 // pred_region
          %s246 = sand.u32 %s40, 1
          %s247 = scalar_lea.sflag [#allocation3], %s246
          %s248 = sand.u32 %s40, 1
          %s249 = smul.addr %s248, 64
          %s250 = scalar_lea.vmem [#allocation2], %s249
          %s251 = smul.u32 8, %s25
          %s253 = ssub.s32 1024, 1024
          %254 = vsyncadd %s247, %s253
          %s255 = smul.addr %s251, 128
          %s256 = scalar_lea.hbm %s0, %s255
          %s257 = sshll.u32 %s250, 4
          %s258 = int_to_ptr.vmem [resolvable:$true] %s257
          %263 = dma.hbm_to_vmem [thread:$0]  %s256, 1024, %s258, %s247, 128, 128, 8
        $region36: #{mlp_forward.1} parent=31 // pred_fallthru
          _
      $region32: #{mlp_forward.1} parent=5 // pred_fallthru
        _
      %p264 = scmp.le.s32.totalorder 1, %s18
      %p265 = scmp.lt.s32.totalorder %s18, 3
      %p266 = pnand %p264, %p265
      %p267 = pneg %p266
      // Predicated region
      $region37: #{mlp_forward.1} parent=5 // pred_check
        _
      $region38: #{mlp_forward.1} parent=5 // pred_check_branch
        %269 = sbr.rel (%p266) target = $region40
      $region39: #{mlp_forward.1} parent=5 // pred_region
        %s270 = ssub.s32 %s18, 1
        %s271 = sand.u32 %s43, 1
        %s272 = scalar_lea.sflag [#allocation3], %s271
        %s273 = sand.u32 %s43, 1
        %s274 = smul.addr %s273, 64
        %s275 = scalar_lea.vmem [#allocation2], %s274
        // Predicated region
        $region41: #{mlp_forward.1} parent=39 // pred_check
          %p276 = pneg %p56
        $region42: #{mlp_forward.1} parent=39 // pred_check_branch
          %278 = sbr.rel (%p276) target = $region44
        $region43: #{mlp_forward.1} parent=39 // pred_region
          %279 = dma.done %s272, 1024
        $region44: #{mlp_forward.1} parent=39 // pred_fallthru
          _
        // Predicated region
        $region45: #{mlp_forward.1} parent=39 // pred_check
          %p280 = pneg %p82
        $region46: #{mlp_forward.1} parent=39 // pred_check_branch
          %282 = sbr.rel (%p280) target = $region48
        $region47: #{mlp_forward.1} parent=39 // pred_region
          %283 = dma.done [#allocation6], 8192
        $region48: #{mlp_forward.1} parent=39 // pred_fallthru
          _
        // Predicated region
        $region49: #{mlp_forward.1} parent=39 // pred_check
          %p284 = pneg %p134
        $region50: #{mlp_forward.1} parent=39 // pred_check_branch
          %286 = sbr.rel (%p284) target = $region52
        $region51: #{mlp_forward.1} parent=39 // pred_region
          %287 = dma.done [#allocation6], 8192
        $region52: #{mlp_forward.1} parent=39 // pred_fallthru
          _
        %s288 = sand.u32 %s43, 1
        %s289 = scalar_lea.sflag [#allocation3], %s288
        %s290 = sand.u32 %s43, 1
        %s291 = smul.addr %s290, 64
        %s292 = scalar_lea.vmem [#allocation2], %s291
        %p293 = pneg %p56
        %p294 = pneg %p53
        %p295 = pneg %p82
        %p296 = pneg %p79
        %s297 = smul.u32 4, %s28
        %p298 = scmp.lt.s32.totalorder %s297, 3
        %s299 = scalar_select %p298, %s297, 3
        %s300 = scalar_lea.vmem %s2, %s299
        %p301 = pneg %p108
        %p302 = pneg %p105
        %p303 = pneg %p134
        %p304 = pneg %p131
        %p305 = pneg %p155
        %p306 = pneg %p152
        %p307 = pneg %p181
        %p308 = pneg %p178
        %s309 = sand.u32 %s168, 1
        %s310 = scalar_lea.sflag [#allocation4], %s309
        %s311 = sand.u32 %s168, 1
        %s312 = smul.addr %s311, 64
        %s313 = scalar_lea.vmem [#allocation8], %s312
        %s314 = smul.u32 8, %s27
        %s315 = smul.u32 4, %s28
        %s316 = smul.u32 4, %s28
        %p317 = scmp.lt.s32.totalorder %s316, 3
        %s318 = scalar_select %p317, %s316, 3
        %s319 = scalar_lea.vmem %s2, %s318
        %s320 = smul.u32 4, %s28
        %s321 = smul.u32 64, %s28
        %s322 = smul.u32 8, %s27
        %p323 = scmp.eq.s32.totalorder %s28, 0
        // Predicated region
        $region53: #{mlp_forward.1} parent=39 // pred_check
          %p324 = pneg %p323
        $region54: #{mlp_forward.1} parent=39 // pred_check_branch
          %326 = sbr.rel (%p324) target = $region56
        $region55: #{mlp_forward.1} parent=39 // pred_region
          %v327 = vld [vmem:[%s4] sm:$0x1]
          %v329 = vlaneseq
          %v330 = vshrl.u32 %v329, 7
          %v331 = vsub.s32 0, %v330
          %v332 = vrot.slane %v327, %v331
          %334 = vst [vmem:[%s313] sm:$0xff] %v332
          %335 = vst [vmem:[%s313 + $0x8] sm:$0xff] %v332
          %336 = vst [vmem:[%s313 + $0x10] sm:$0xff] %v332
          %337 = vst [vmem:[%s313 + $0x18] sm:$0xff] %v332
          %338 = vst [vmem:[%s313 + $0x20] sm:$0xff] %v332
          %339 = vst [vmem:[%s313 + $0x28] sm:$0xff] %v332
          %340 = vst [vmem:[%s313 + $0x30] sm:$0xff] %v332
          %341 = vst [vmem:[%s313 + $0x38] sm:$0xff] %v332
        $region56: #{mlp_forward.1} parent=39 // pred_fallthru
          _
        %v342 = vld [vmem:[%s275] sm:$0xff]
        %v343 = vld [vmem:[%s275 + $0x8] sm:$0xff]
        %v344 = vld [vmem:[%s275 + $0x10] sm:$0xff]
        %v345 = vld [vmem:[%s275 + $0x18] sm:$0xff]
        %v346 = vld [vmem:[%s275 + $0x20] sm:$0xff]
        %v347 = vld [vmem:[%s275 + $0x28] sm:$0xff]
        %v348 = vld [vmem:[%s275 + $0x30] sm:$0xff]
        %v349 = vld [vmem:[%s275 + $0x38] sm:$0xff]
        %v350 = vld [vmem:[#allocation5] sm:$0xff]
        %v351 = vld [vmem:[#allocation5 + $0x8] sm:$0xff]
        %v352 = vld [vmem:[#allocation5 + $0x10] sm:$0xff]
        %v353 = vld [vmem:[#allocation5 + $0x18] sm:$0xff]
        %v354 = vld [vmem:[#allocation5 + $0x20] sm:$0xff]
        %v355 = vld [vmem:[#allocation5 + $0x28] sm:$0xff]
        %v356 = vld [vmem:[#allocation5 + $0x30] sm:$0xff]
        %v357 = vld [vmem:[#allocation5 + $0x38] sm:$0xff]
        %v358 = vld [vmem:[#allocation5 + $0x40] sm:$0xff]
        %v359 = vld [vmem:[#allocation5 + $0x48] sm:$0xff]
        %v360 = vld [vmem:[#allocation5 + $0x50] sm:$0xff]
        %v361 = vld [vmem:[#allocation5 + $0x58] sm:$0xff]
        %v362 = vld [vmem:[#allocation5 + $0x60] sm:$0xff]
        %v363 = vld [vmem:[#allocation5 + $0x68] sm:$0xff]
        %v364 = vld [vmem:[#allocation5 + $0x70] sm:$0xff]
        %v365 = vld [vmem:[#allocation5 + $0x78] sm:$0xff]
        %v366 = vld [vmem:[#allocation5 + $0x80] sm:$0xff]
        %v367 = vld [vmem:[#allocation5 + $0x88] sm:$0xff]
        %v368 = vld [vmem:[#allocation5 + $0x90] sm:$0xff]
        %v369 = vld [vmem:[#allocation5 + $0x98] sm:$0xff]
        %v370 = vld [vmem:[#allocation5 + $0xa0] sm:$0xff]
        %v371 = vld [vmem:[#allocation5 + $0xa8] sm:$0xff]
        %v372 = vld [vmem:[#allocation5 + $0xb0] sm:$0xff]
        %v373 = vld [vmem:[#allocation5 + $0xb8] sm:$0xff]
        %v374 = vld [vmem:[#allocation5 + $0xc0] sm:$0xff]
        %v375 = vld [vmem:[#allocation5 + $0xc8] sm:$0xff]
        %v376 = vld [vmem:[#allocation5 + $0xd0] sm:$0xff]
        %v377 = vld [vmem:[#allocation5 + $0xd8] sm:$0xff]
        %v378 = vld [vmem:[#allocation5 + $0xe0] sm:$0xff]
        %v379 = vld [vmem:[#allocation5 + $0xe8] sm:$0xff]
        %v380 = vld [vmem:[#allocation5 + $0xf0] sm:$0xff]
        %v381 = vld [vmem:[#allocation5 + $0xf8] sm:$0xff]
        %v382 = vld [vmem:[#allocation5 + $0x100] sm:$0xff]
        %v383 = vld [vmem:[#allocation5 + $0x108] sm:$0xff]
        %v384 = vld [vmem:[#allocation5 + $0x110] sm:$0xff]
        %v385 = vld [vmem:[#allocation5 + $0x118] sm:$0xff]
        %v386 = vld [vmem:[#allocation5 + $0x120] sm:$0xff]
        %v387 = vld [vmem:[#allocation5 + $0x128] sm:$0xff]
        %v388 = vld [vmem:[#allocation5 + $0x130] sm:$0xff]
        %v389 = vld [vmem:[#allocation5 + $0x138] sm:$0xff]
        %v390 = vld [vmem:[#allocation5 + $0x140] sm:$0xff]
        %v391 = vld [vmem:[#allocation5 + $0x148] sm:$0xff]
        %v392 = vld [vmem:[#allocation5 + $0x150] sm:$0xff]
        %v393 = vld [vmem:[#allocation5 + $0x158] sm:$0xff]
        %v394 = vld [vmem:[#allocation5 + $0x160] sm:$0xff]
        %v395 = vld [vmem:[#allocation5 + $0x168] sm:$0xff]
        %v396 = vld [vmem:[#allocation5 + $0x170] sm:$0xff]
        %v397 = vld [vmem:[#allocation5 + $0x178] sm:$0xff]
        %v398 = vld [vmem:[#allocation5 + $0x180] sm:$0xff]
        %v399 = vld [vmem:[#allocation5 + $0x188] sm:$0xff]
        %v400 = vld [vmem:[#allocation5 + $0x190] sm:$0xff]
        %v401 = vld [vmem:[#allocation5 + $0x198] sm:$0xff]
        %v402 = vld [vmem:[#allocation5 + $0x1a0] sm:$0xff]
        %v403 = vld [vmem:[#allocation5 + $0x1a8] sm:$0xff]
        %v404 = vld [vmem:[#allocation5 + $0x1b0] sm:$0xff]
        %v405 = vld [vmem:[#allocation5 + $0x1b8] sm:$0xff]
        %v406 = vld [vmem:[#allocation5 + $0x1c0] sm:$0xff]
        %v407 = vld [vmem:[#allocation5 + $0x1c8] sm:$0xff]
        %v408 = vld [vmem:[#allocation5 + $0x1d0] sm:$0xff]
        %v409 = vld [vmem:[#allocation5 + $0x1d8] sm:$0xff]
        %v410 = vld [vmem:[#allocation5 + $0x1e0] sm:$0xff]
        %v411 = vld [vmem:[#allocation5 + $0x1e8] sm:$0xff]
        %v412 = vld [vmem:[#allocation5 + $0x1f0] sm:$0xff]
        %v413 = vld [vmem:[#allocation5 + $0x1f8] sm:$0xff]
        %v414 = vld [vmem:[%s319] sm:$0xf]
        %v416 = vlaneseq
        %v417 = vshrl.u32 %v416, 7
        %v418 = vsub.s32 0, %v417
        %v419 = vrot.slane %v414, %v418
        %v420 = vlaneseq
        %v421 = vshrl.u32 %v420, 7
        %v422 = vsub.s32 1, %v421
        %v423 = vrot.slane %v414, %v422
        %v424 = vlaneseq
        %v425 = vshrl.u32 %v424, 7
        %v426 = vsub.s32 2, %v425
        %v427 = vrot.slane %v414, %v426
        %v428 = vlaneseq
        %v429 = vshrl.u32 %v428, 7
        %v430 = vsub.s32 3, %v429
        %v431 = vrot.slane %v414, %v430
        %436 = vmatprep.subr.mxu0 %v411
        %437 = vmatpush1.msra.mxu0 %v410
        %438 = vmatprep.subr.mxu0 %v407
        %439 = vmatpush1.msra.mxu0 %v406
        %440 = vmatprep.subr.mxu0 %v403
        %441 = vmatpush1.msra.mxu0 %v402
        %442 = vmatprep.subr.mxu0 %v399
        %443 = vmatpush1.msra.mxu0 %v398
        %444 = vmatprep.subr.mxu0 %v395
        %445 = vmatpush1.msra.mxu0 %v394
        %446 = vmatprep.subr.mxu0 %v391
        %447 = vmatpush1.msra.mxu0 %v390
        %448 = vmatprep.subr.mxu0 %v387
        %449 = vmatpush1.msra.mxu0 %v386
        %450 = vmatprep.subr.mxu0 %v383
        %451 = vmatpush1.msra.mxu0 %v382
        %452 = vmatprep.subr.mxu0 %v379
        %453 = vmatpush1.msra.mxu0 %v378
        %454 = vmatprep.subr.mxu0 %v375
        %455 = vmatpush1.msra.mxu0 %v374
        %456 = vmatprep.subr.mxu0 %v371
        %457 = vmatpush1.msra.mxu0 %v370
        %458 = vmatprep.subr.mxu0 %v367
        %459 = vmatpush1.msra.mxu0 %v366
        %460 = vmatprep.subr.mxu0 %v363
        %461 = vmatpush1.msra.mxu0 %v362
        %462 = vmatprep.subr.mxu0 %v359
        %463 = vmatpush1.msra.mxu0 %v358
        %464 = vmatprep.subr.mxu0 %v355
        %465 = vmatpush1.msra.mxu0 %v354
        %466 = vmatprep.subr.mxu0 %v351
        %467 = vmatpush1.msra.mxu0 %v350
        %468 = vmatprep.subr.mxu0 0.0
        %469 = vmatpush2.msra.mxu0 0.0
        %470 = vmatprep.subr.mxu0 0.0
        %471 = vmatpush2.msra.mxu0 0.0
        %472 = vmatprep.subr.mxu0 0.0
        %473 = vmatpush2.msra.mxu0 0.0
        %474 = vmatprep.subr.mxu0 0.0
        %475 = vmatpush2.msra.mxu0 0.0
        %476 = vmatprep.subr.mxu0 0.0
        %477 = vmatpush2.msra.mxu0 0.0
        %478 = vmatprep.subr.mxu0 0.0
        %479 = vmatpush2.msra.mxu0 0.0
        %480 = vmatprep.subr.mxu0 0.0
        %481 = vmatpush2.msra.mxu0 0.0
        %482 = vmatprep.subr.mxu0 0.0
        %483 = vmatpush2.msra.mxu0 0.0
        %484 = vmatprep.subr.mxu0 0.0
        %485 = vmatpush2.msra.mxu0 0.0
        %486 = vmatprep.subr.mxu0 0.0
        %487 = vmatpush2.msra.mxu0 0.0
        %488 = vmatprep.subr.mxu0 0.0
        %489 = vmatpush2.msra.mxu0 0.0
        %490 = vmatprep.subr.mxu0 0.0
        %491 = vmatpush2.msra.mxu0 0.0
        %492 = vmatprep.subr.mxu0 0.0
        %493 = vmatpush2.msra.mxu0 0.0
        %494 = vmatprep.subr.mxu0 0.0
        %495 = vmatpush2.msra.mxu0 0.0
        %496 = vmatprep.subr.mxu0 0.0
        %497 = vmatpush2.msra.mxu0 0.0
        %498 = vmatprep.subr.mxu0 0.0
        %499 = vmatpush2.msra.mxu0 0.0
        %500 = vmatprep.mubr.f32.mxu0 0.0
        %501 = vmatmul.mubr.f32.gmra.mxu0 %v342
        %v502 = vpop.f32.mrf.mxu0
        %v503 = vadd.f32 %v419, %v502
        %v504 = vpop.f32.mrf.mxu0
        %v505 = vadd.f32 %v423, %v504
        %506 = vmatprep.mubr.f32.mxu0 0.0
        %507 = vmatmul.mubr.f32.gmra.mxu0 %v343
        %v508 = vpop.f32.mrf.mxu0
        %v509 = vadd.f32 %v419, %v508
        %v510 = vpop.f32.mrf.mxu0
        %v511 = vadd.f32 %v423, %v510
        %512 = vmatprep.mubr.f32.mxu0 0.0
        %513 = vmatmul.mubr.f32.gmra.mxu0 %v344
        %v514 = vpop.f32.mrf.mxu0
        %v515 = vadd.f32 %v419, %v514
        %v516 = vpop.f32.mrf.mxu0
        %v517 = vadd.f32 %v423, %v516
        %518 = vmatprep.mubr.f32.mxu0 0.0
        %519 = vmatmul.mubr.f32.gmra.mxu0 %v345
        %v520 = vpop.f32.mrf.mxu0
        %v521 = vadd.f32 %v419, %v520
        %v522 = vpop.f32.mrf.mxu0
        %v523 = vadd.f32 %v423, %v522
        %524 = vmatprep.mubr.f32.mxu0 0.0
        %525 = vmatmul.mubr.f32.gmra.mxu0 %v346
        %v526 = vpop.f32.mrf.mxu0
        %v527 = vadd.f32 %v419, %v526
        %v528 = vpop.f32.mrf.mxu0
        %v529 = vadd.f32 %v423, %v528
        %530 = vmatprep.mubr.f32.mxu0 0.0
        %531 = vmatmul.mubr.f32.gmra.mxu0 %v347
        %v532 = vpop.f32.mrf.mxu0
        %v533 = vadd.f32 %v419, %v532
        %v534 = vpop.f32.mrf.mxu0
        %v535 = vadd.f32 %v423, %v534
        %536 = vmatprep.mubr.f32.mxu0 0.0
        %537 = vmatmul.mubr.f32.gmra.mxu0 %v348
        %v538 = vpop.f32.mrf.mxu0
        %v539 = vadd.f32 %v419, %v538
        %v540 = vpop.f32.mrf.mxu0
        %v541 = vadd.f32 %v423, %v540
        %542 = vmatprep.mubr.f32.mxu0 0.0
        %543 = vmatmul.mubr.f32.gmra.mxu0 %v349
        %v544 = vpop.f32.mrf.mxu0
        %v545 = vadd.f32 %v419, %v544
        %v546 = vpop.f32.mrf.mxu0
        %v547 = vadd.f32 %v423, %v546
        %548 = vdwg.mxu0
        %549 = vmatprep.subr.mxu0 %v413
        %550 = vmatpush1.msra.mxu0 %v412
        %551 = vmatprep.subr.mxu0 %v409
        %552 = vmatpush1.msra.mxu0 %v408
        %553 = vmatprep.subr.mxu0 %v405
        %554 = vmatpush1.msra.mxu0 %v404
        %555 = vmatprep.subr.mxu0 %v401
        %556 = vmatpush1.msra.mxu0 %v400
        %557 = vmatprep.subr.mxu0 %v397
        %558 = vmatpush1.msra.mxu0 %v396
        %559 = vmatprep.subr.mxu0 %v393
        %560 = vmatpush1.msra.mxu0 %v392
        %561 = vmatprep.subr.mxu0 %v389
        %562 = vmatpush1.msra.mxu0 %v388
        %563 = vmatprep.subr.mxu0 %v385
        %564 = vmatpush1.msra.mxu0 %v384
        %565 = vmatprep.subr.mxu0 %v381
        %566 = vmatpush1.msra.mxu0 %v380
        %567 = vmatprep.subr.mxu0 %v377
        %568 = vmatpush1.msra.mxu0 %v376
        %569 = vmatprep.subr.mxu0 %v373
        %570 = vmatpush1.msra.mxu0 %v372
        %571 = vmatprep.subr.mxu0 %v369
        %572 = vmatpush1.msra.mxu0 %v368
        %573 = vmatprep.subr.mxu0 %v365
        %574 = vmatpush1.msra.mxu0 %v364
        %575 = vmatprep.subr.mxu0 %v361
        %576 = vmatpush1.msra.mxu0 %v360
        %577 = vmatprep.subr.mxu0 %v357
        %578 = vmatpush1.msra.mxu0 %v356
        %579 = vmatprep.subr.mxu0 %v353
        %580 = vmatpush1.msra.mxu0 %v352
        %581 = vmatprep.subr.mxu0 0.0
        %582 = vmatpush2.msra.mxu0 0.0
        %583 = vmatprep.subr.mxu0 0.0
        %584 = vmatpush2.msra.mxu0 0.0
        %585 = vmatprep.subr.mxu0 0.0
        %586 = vmatpush2.msra.mxu0 0.0
        %587 = vmatprep.subr.mxu0 0.0
        %588 = vmatpush2.msra.mxu0 0.0
        %589 = vmatprep.subr.mxu0 0.0
        %590 = vmatpush2.msra.mxu0 0.0
        %591 = vmatprep.subr.mxu0 0.0
        %592 = vmatpush2.msra.mxu0 0.0
        %593 = vmatprep.subr.mxu0 0.0
        %594 = vmatpush2.msra.mxu0 0.0
        %595 = vmatprep.subr.mxu0 0.0
        %596 = vmatpush2.msra.mxu0 0.0
        %597 = vmatprep.subr.mxu0 0.0
        %598 = vmatpush2.msra.mxu0 0.0
        %599 = vmatprep.subr.mxu0 0.0
        %600 = vmatpush2.msra.mxu0 0.0
        %601 = vmatprep.subr.mxu0 0.0
        %602 = vmatpush2.msra.mxu0 0.0
        %603 = vmatprep.subr.mxu0 0.0
        %604 = vmatpush2.msra.mxu0 0.0
        %605 = vmatprep.subr.mxu0 0.0
        %606 = vmatpush2.msra.mxu0 0.0
        %607 = vmatprep.subr.mxu0 0.0
        %608 = vmatpush2.msra.mxu0 0.0
        %609 = vmatprep.subr.mxu0 0.0
        %610 = vmatpush2.msra.mxu0 0.0
        %611 = vmatprep.subr.mxu0 0.0
        %612 = vmatpush2.msra.mxu0 0.0
        %613 = vmatprep.mubr.f32.mxu0 0.0
        %614 = vmatmul.mubr.f32.gmra.mxu0 %v342
        %v615 = vpop.f32.mrf.mxu0
        %v616 = vadd.f32 %v427, %v615
        %v617 = vpop.f32.mrf.mxu0
        %v618 = vadd.f32 %v431, %v617
        %619 = vmatprep.mubr.f32.mxu0 0.0
        %620 = vmatmul.mubr.f32.gmra.mxu0 %v343
        %v621 = vpop.f32.mrf.mxu0
        %v622 = vadd.f32 %v427, %v621
        %v623 = vpop.f32.mrf.mxu0
        %v624 = vadd.f32 %v431, %v623
        %625 = vmatprep.mubr.f32.mxu0 0.0
        %626 = vmatmul.mubr.f32.gmra.mxu0 %v344
        %v627 = vpop.f32.mrf.mxu0
        %v628 = vadd.f32 %v427, %v627
        %v629 = vpop.f32.mrf.mxu0
        %v630 = vadd.f32 %v431, %v629
        %631 = vmatprep.mubr.f32.mxu0 0.0
        %632 = vmatmul.mubr.f32.gmra.mxu0 %v345
        %v633 = vpop.f32.mrf.mxu0
        %v634 = vadd.f32 %v427, %v633
        %v635 = vpop.f32.mrf.mxu0
        %v636 = vadd.f32 %v431, %v635
        %637 = vmatprep.mubr.f32.mxu0 0.0
        %638 = vmatmul.mubr.f32.gmra.mxu0 %v346
        %v639 = vpop.f32.mrf.mxu0
        %v640 = vadd.f32 %v427, %v639
        %v641 = vpop.f32.mrf.mxu0
        %v642 = vadd.f32 %v431, %v641
        %643 = vmatprep.mubr.f32.mxu0 0.0
        %644 = vmatmul.mubr.f32.gmra.mxu0 %v347
        %v645 = vpop.f32.mrf.mxu0
        %v646 = vadd.f32 %v427, %v645
        %v647 = vpop.f32.mrf.mxu0
        %v648 = vadd.f32 %v431, %v647
        %649 = vmatprep.mubr.f32.mxu0 0.0
        %650 = vmatmul.mubr.f32.gmra.mxu0 %v348
        %v651 = vpop.f32.mrf.mxu0
        %v652 = vadd.f32 %v427, %v651
        %v653 = vpop.f32.mrf.mxu0
        %v654 = vadd.f32 %v431, %v653
        %655 = vmatprep.mubr.f32.mxu0 0.0
        %656 = vmatmul.mubr.f32.gmra.mxu0 %v349
        %v657 = vpop.f32.mrf.mxu0
        %v658 = vadd.f32 %v427, %v657
        %v659 = vpop.f32.mrf.mxu0
        %v660 = vadd.f32 %v431, %v659
        %661 = vdwg.mxu0
        %v662 = vmul.f32 %v503, 0.5
        %v663 = vmul.f32 %v505, 0.5
        %v664 = vmul.f32 %v616, 0.5
        %v665 = vmul.f32 %v618, 0.5
        %v666 = vmul.f32 %v509, 0.5
        %v667 = vmul.f32 %v511, 0.5
        %v668 = vmul.f32 %v622, 0.5
        %v669 = vmul.f32 %v624, 0.5
        %v670 = vmul.f32 %v515, 0.5
        %v671 = vmul.f32 %v517, 0.5
        %v672 = vmul.f32 %v628, 0.5
        %v673 = vmul.f32 %v630, 0.5
        %v674 = vmul.f32 %v521, 0.5
        %v675 = vmul.f32 %v523, 0.5
        %v676 = vmul.f32 %v634, 0.5
        %v677 = vmul.f32 %v636, 0.5
        %v678 = vmul.f32 %v527, 0.5
        %v679 = vmul.f32 %v529, 0.5
        %v680 = vmul.f32 %v640, 0.5
        %v681 = vmul.f32 %v642, 0.5
        %v682 = vmul.f32 %v533, 0.5
        %v683 = vmul.f32 %v535, 0.5
        %v684 = vmul.f32 %v646, 0.5
        %v685 = vmul.f32 %v648, 0.5
        %v686 = vmul.f32 %v539, 0.5
        %v687 = vmul.f32 %v541, 0.5
        %v688 = vmul.f32 %v652, 0.5
        %v689 = vmul.f32 %v654, 0.5
        %v690 = vmul.f32 %v545, 0.5
        %v691 = vmul.f32 %v547, 0.5
        %v692 = vmul.f32 %v658, 0.5
        %v693 = vmul.f32 %v660, 0.5
        %v694 = vmul.f32 %v503, %v503
        %v695 = vmul.f32 %v505, %v505
        %v696 = vmul.f32 %v616, %v616
        %v697 = vmul.f32 %v618, %v618
        %v698 = vmul.f32 %v509, %v509
        %v699 = vmul.f32 %v511, %v511
        %v700 = vmul.f32 %v622, %v622
        %v701 = vmul.f32 %v624, %v624
        %v702 = vmul.f32 %v515, %v515
        %v703 = vmul.f32 %v517, %v517
        %v704 = vmul.f32 %v628, %v628
        %v705 = vmul.f32 %v630, %v630
        %v706 = vmul.f32 %v521, %v521
        %v707 = vmul.f32 %v523, %v523
        %v708 = vmul.f32 %v634, %v634
        %v709 = vmul.f32 %v636, %v636
        %v710 = vmul.f32 %v527, %v527
        %v711 = vmul.f32 %v529, %v529
        %v712 = vmul.f32 %v640, %v640
        %v713 = vmul.f32 %v642, %v642
        %v714 = vmul.f32 %v533, %v533
        %v715 = vmul.f32 %v535, %v535
        %v716 = vmul.f32 %v646, %v646
        %v717 = vmul.f32 %v648, %v648
        %v718 = vmul.f32 %v539, %v539
        %v719 = vmul.f32 %v541, %v541
        %v720 = vmul.f32 %v652, %v652
        %v721 = vmul.f32 %v654, %v654
        %v722 = vmul.f32 %v545, %v545
        %v723 = vmul.f32 %v547, %v547
        %v724 = vmul.f32 %v658, %v658
        %v725 = vmul.f32 %v660, %v660
        %v726 = vmul.f32 %v694, %v503
        %v727 = vmul.f32 %v695, %v505
        %v728 = vmul.f32 %v696, %v616
        %v729 = vmul.f32 %v697, %v618
        %v730 = vmul.f32 %v698, %v509
        %v731 = vmul.f32 %v699, %v511
        %v732 = vmul.f32 %v700, %v622
        %v733 = vmul.f32 %v701, %v624
        %v734 = vmul.f32 %v702, %v515
        %v735 = vmul.f32 %v703, %v517
        %v736 = vmul.f32 %v704, %v628
        %v737 = vmul.f32 %v705, %v630
        %v738 = vmul.f32 %v706, %v521
        %v739 = vmul.f32 %v707, %v523
        %v740 = vmul.f32 %v708, %v634
        %v741 = vmul.f32 %v709, %v636
        %v742 = vmul.f32 %v710, %v527
        %v743 = vmul.f32 %v711, %v529
        %v744 = vmul.f32 %v712, %v640
        %v745 = vmul.f32 %v713, %v642
        %v746 = vmul.f32 %v714, %v533
        %v747 = vmul.f32 %v715, %v535
        %v748 = vmul.f32 %v716, %v646
        %v749 = vmul.f32 %v717, %v648
        %v750 = vmul.f32 %v718, %v539
        %v751 = vmul.f32 %v719, %v541
        %v752 = vmul.f32 %v720, %v652
        %v753 = vmul.f32 %v721, %v654
        %v754 = vmul.f32 %v722, %v545
        %v755 = vmul.f32 %v723, %v547
        %v756 = vmul.f32 %v724, %v658
        %v757 = vmul.f32 %v725, %v660
        %v758 = vmul.f32 %v726, 0.044715
        %v759 = vmul.f32 %v727, 0.044715
        %v760 = vmul.f32 %v728, 0.044715
        %v761 = vmul.f32 %v729, 0.044715
        %v762 = vmul.f32 %v730, 0.044715
        %v763 = vmul.f32 %v731, 0.044715
        %v764 = vmul.f32 %v732, 0.044715
        %v765 = vmul.f32 %v733, 0.044715
        %v766 = vmul.f32 %v734, 0.044715
        %v767 = vmul.f32 %v735, 0.044715
        %v768 = vmul.f32 %v736, 0.044715
        %v769 = vmul.f32 %v737, 0.044715
        %v770 = vmul.f32 %v738, 0.044715
        %v771 = vmul.f32 %v739, 0.044715
        %v772 = vmul.f32 %v740, 0.044715
        %v773 = vmul.f32 %v741, 0.044715
        %v774 = vmul.f32 %v742, 0.044715
        %v775 = vmul.f32 %v743, 0.044715
        %v776 = vmul.f32 %v744, 0.044715
        %v777 = vmul.f32 %v745, 0.044715
        %v778 = vmul.f32 %v746, 0.044715
        %v779 = vmul.f32 %v747, 0.044715
        %v780 = vmul.f32 %v748, 0.044715
        %v781 = vmul.f32 %v749, 0.044715
        %v782 = vmul.f32 %v750, 0.044715
        %v783 = vmul.f32 %v751, 0.044715
        %v784 = vmul.f32 %v752, 0.044715
        %v785 = vmul.f32 %v753, 0.044715
        %v786 = vmul.f32 %v754, 0.044715
        %v787 = vmul.f32 %v755, 0.044715
        %v788 = vmul.f32 %v756, 0.044715
        %v789 = vmul.f32 %v757, 0.044715
        %v790 = vadd.f32 %v503, %v758
        %v791 = vadd.f32 %v505, %v759
        %v792 = vadd.f32 %v616, %v760
        %v793 = vadd.f32 %v618, %v761
        %v794 = vadd.f32 %v509, %v762
        %v795 = vadd.f32 %v511, %v763
        %v796 = vadd.f32 %v622, %v764
        %v797 = vadd.f32 %v624, %v765
        %v798 = vadd.f32 %v515, %v766
        %v799 = vadd.f32 %v517, %v767
        %v800 = vadd.f32 %v628, %v768
        %v801 = vadd.f32 %v630, %v769
        %v802 = vadd.f32 %v521, %v770
        %v803 = vadd.f32 %v523, %v771
        %v804 = vadd.f32 %v634, %v772
        %v805 = vadd.f32 %v636, %v773
        %v806 = vadd.f32 %v527, %v774
        %v807 = vadd.f32 %v529, %v775
        %v808 = vadd.f32 %v640, %v776
        %v809 = vadd.f32 %v642, %v777
        %v810 = vadd.f32 %v533, %v778
        %v811 = vadd.f32 %v535, %v779
        %v812 = vadd.f32 %v646, %v780
        %v813 = vadd.f32 %v648, %v781
        %v814 = vadd.f32 %v539, %v782
        %v815 = vadd.f32 %v541, %v783
        %v816 = vadd.f32 %v652, %v784
        %v817 = vadd.f32 %v654, %v785
        %v818 = vadd.f32 %v545, %v786
        %v819 = vadd.f32 %v547, %v787
        %v820 = vadd.f32 %v658, %v788
        %v821 = vadd.f32 %v660, %v789
        %v822 = vmul.f32 %v790, 0.7978845
        %v823 = vmul.f32 %v791, 0.7978845
        %v824 = vmul.f32 %v792, 0.7978845
        %v825 = vmul.f32 %v793, 0.7978845
        %v826 = vmul.f32 %v794, 0.7978845
        %v827 = vmul.f32 %v795, 0.7978845
        %v828 = vmul.f32 %v796, 0.7978845
        %v829 = vmul.f32 %v797, 0.7978845
        %v830 = vmul.f32 %v798, 0.7978845
        %v831 = vmul.f32 %v799, 0.7978845
        %v832 = vmul.f32 %v800, 0.7978845
        %v833 = vmul.f32 %v801, 0.7978845
        %v834 = vmul.f32 %v802, 0.7978845
        %v835 = vmul.f32 %v803, 0.7978845
        %v836 = vmul.f32 %v804, 0.7978845
        %v837 = vmul.f32 %v805, 0.7978845
        %v838 = vmul.f32 %v806, 0.7978845
        %v839 = vmul.f32 %v807, 0.7978845
        %v840 = vmul.f32 %v808, 0.7978845
        %v841 = vmul.f32 %v809, 0.7978845
        %v842 = vmul.f32 %v810, 0.7978845
        %v843 = vmul.f32 %v811, 0.7978845
        %v844 = vmul.f32 %v812, 0.7978845
        %v845 = vmul.f32 %v813, 0.7978845
        %v846 = vmul.f32 %v814, 0.7978845
        %v847 = vmul.f32 %v815, 0.7978845
        %v848 = vmul.f32 %v816, 0.7978845
        %v849 = vmul.f32 %v817, 0.7978845
        %v850 = vmul.f32 %v818, 0.7978845
        %v851 = vmul.f32 %v819, 0.7978845
        %v852 = vmul.f32 %v820, 0.7978845
        %v853 = vmul.f32 %v821, 0.7978845
        %v854 = vtanh.pop %v822
        %v855 = vtanh.pop %v823
        %v856 = vtanh.pop %v824
        %v857 = vtanh.pop %v825
        %v858 = vtanh.pop %v826
        %v859 = vtanh.pop %v827
        %v860 = vtanh.pop %v828
        %v861 = vtanh.pop %v829
        %v862 = vtanh.pop %v830
        %v863 = vtanh.pop %v831
        %v864 = vtanh.pop %v832
        %v865 = vtanh.pop %v833
        %v866 = vtanh.pop %v834
        %v867 = vtanh.pop %v835
        %v868 = vtanh.pop %v836
        %v869 = vtanh.pop %v837
        %v870 = vtanh.pop %v838
        %v871 = vtanh.pop %v839
        %v872 = vtanh.pop %v840
        %v873 = vtanh.pop %v841
        %v874 = vtanh.pop %v842
        %v875 = vtanh.pop %v843
        %v876 = vtanh.pop %v844
        %v877 = vtanh.pop %v845
        %v878 = vtanh.pop %v846
        %v879 = vtanh.pop %v847
        %v880 = vtanh.pop %v848
        %v881 = vtanh.pop %v849
        %v882 = vtanh.pop %v850
        %v883 = vtanh.pop %v851
        %v884 = vtanh.pop %v852
        %v885 = vtanh.pop %v853
        %v886 = vadd.f32 %v854, 1.0
        %v887 = vadd.f32 %v855, 1.0
        %v888 = vadd.f32 %v856, 1.0
        %v889 = vadd.f32 %v857, 1.0
        %v890 = vadd.f32 %v858, 1.0
        %v891 = vadd.f32 %v859, 1.0
        %v892 = vadd.f32 %v860, 1.0
        %v893 = vadd.f32 %v861, 1.0
        %v894 = vadd.f32 %v862, 1.0
        %v895 = vadd.f32 %v863, 1.0
        %v896 = vadd.f32 %v864, 1.0
        %v897 = vadd.f32 %v865, 1.0
        %v898 = vadd.f32 %v866, 1.0
        %v899 = vadd.f32 %v867, 1.0
        %v900 = vadd.f32 %v868, 1.0
        %v901 = vadd.f32 %v869, 1.0
        %v902 = vadd.f32 %v870, 1.0
        %v903 = vadd.f32 %v871, 1.0
        %v904 = vadd.f32 %v872, 1.0
        %v905 = vadd.f32 %v873, 1.0
        %v906 = vadd.f32 %v874, 1.0
        %v907 = vadd.f32 %v875, 1.0
        %v908 = vadd.f32 %v876, 1.0
        %v909 = vadd.f32 %v877, 1.0
        %v910 = vadd.f32 %v878, 1.0
        %v911 = vadd.f32 %v879, 1.0
        %v912 = vadd.f32 %v880, 1.0
        %v913 = vadd.f32 %v881, 1.0
        %v914 = vadd.f32 %v882, 1.0
        %v915 = vadd.f32 %v883, 1.0
        %v916 = vadd.f32 %v884, 1.0
        %v917 = vadd.f32 %v885, 1.0
        %v918 = vmul.f32 %v662, %v886
        %v919 = vmul.f32 %v663, %v887
        %v920 = vmul.f32 %v664, %v888
        %v921 = vmul.f32 %v665, %v889
        %v922 = vmul.f32 %v666, %v890
        %v923 = vmul.f32 %v667, %v891
        %v924 = vmul.f32 %v668, %v892
        %v925 = vmul.f32 %v669, %v893
        %v926 = vmul.f32 %v670, %v894
        %v927 = vmul.f32 %v671, %v895
        %v928 = vmul.f32 %v672, %v896
        %v929 = vmul.f32 %v673, %v897
        %v930 = vmul.f32 %v674, %v898
        %v931 = vmul.f32 %v675, %v899
        %v932 = vmul.f32 %v676, %v900
        %v933 = vmul.f32 %v677, %v901
        %v934 = vmul.f32 %v678, %v902
        %v935 = vmul.f32 %v679, %v903
        %v936 = vmul.f32 %v680, %v904
        %v937 = vmul.f32 %v681, %v905
        %v938 = vmul.f32 %v682, %v906
        %v939 = vmul.f32 %v683, %v907
        %v940 = vmul.f32 %v684, %v908
        %v941 = vmul.f32 %v685, %v909
        %v942 = vmul.f32 %v686, %v910
        %v943 = vmul.f32 %v687, %v911
        %v944 = vmul.f32 %v688, %v912
        %v945 = vmul.f32 %v689, %v913
        %v946 = vmul.f32 %v690, %v914
        %v947 = vmul.f32 %v691, %v915
        %v948 = vmul.f32 %v692, %v916
        %v949 = vmul.f32 %v693, %v917
        %v950 = vld [vmem:[%s313] sm:$0xff]
        %v951 = vld [vmem:[%s313 + $0x8] sm:$0xff]
        %v952 = vld [vmem:[%s313 + $0x10] sm:$0xff]
        %v953 = vld [vmem:[%s313 + $0x18] sm:$0xff]
        %v954 = vld [vmem:[%s313 + $0x20] sm:$0xff]
        %v955 = vld [vmem:[%s313 + $0x28] sm:$0xff]
        %v956 = vld [vmem:[%s313 + $0x30] sm:$0xff]
        %v957 = vld [vmem:[%s313 + $0x38] sm:$0xff]
        %v958 = vld [vmem:[#allocation7] sm:$0xff]
        %v959 = vld [vmem:[#allocation7 + $0x8] sm:$0xff]
        %v960 = vld [vmem:[#allocation7 + $0x10] sm:$0xff]
        %v961 = vld [vmem:[#allocation7 + $0x18] sm:$0xff]
        %v962 = vld [vmem:[#allocation7 + $0x20] sm:$0xff]
        %v963 = vld [vmem:[#allocation7 + $0x28] sm:$0xff]
        %v964 = vld [vmem:[#allocation7 + $0x30] sm:$0xff]
        %v965 = vld [vmem:[#allocation7 + $0x38] sm:$0xff]
        %v966 = vld [vmem:[#allocation7 + $0x40] sm:$0xff]
        %v967 = vld [vmem:[#allocation7 + $0x48] sm:$0xff]
        %v968 = vld [vmem:[#allocation7 + $0x50] sm:$0xff]
        %v969 = vld [vmem:[#allocation7 + $0x58] sm:$0xff]
        %v970 = vld [vmem:[#allocation7 + $0x60] sm:$0xff]
        %v971 = vld [vmem:[#allocation7 + $0x68] sm:$0xff]
        %v972 = vld [vmem:[#allocation7 + $0x70] sm:$0xff]
        %v973 = vld [vmem:[#allocation7 + $0x78] sm:$0xff]
        %v974 = vld [vmem:[#allocation7 + $0x80] sm:$0xff]
        %v975 = vld [vmem:[#allocation7 + $0x88] sm:$0xff]
        %v976 = vld [vmem:[#allocation7 + $0x90] sm:$0xff]
        %v977 = vld [vmem:[#allocation7 + $0x98] sm:$0xff]
        %v978 = vld [vmem:[#allocation7 + $0xa0] sm:$0xff]
        %v979 = vld [vmem:[#allocation7 + $0xa8] sm:$0xff]
        %v980 = vld [vmem:[#allocation7 + $0xb0] sm:$0xff]
        %v981 = vld [vmem:[#allocation7 + $0xb8] sm:$0xff]
        %v982 = vld [vmem:[#allocation7 + $0xc0] sm:$0xff]
        %v983 = vld [vmem:[#allocation7 + $0xc8] sm:$0xff]
        %v984 = vld [vmem:[#allocation7 + $0xd0] sm:$0xff]
        %v985 = vld [vmem:[#allocation7 + $0xd8] sm:$0xff]
        %v986 = vld [vmem:[#allocation7 + $0xe0] sm:$0xff]
        %v987 = vld [vmem:[#allocation7 + $0xe8] sm:$0xff]
        %v988 = vld [vmem:[#allocation7 + $0xf0] sm:$0xff]
        %v989 = vld [vmem:[#allocation7 + $0xf8] sm:$0xff]
        %v990 = vld [vmem:[#allocation7 + $0x100] sm:$0xff]
        %v991 = vld [vmem:[#allocation7 + $0x108] sm:$0xff]
        %v992 = vld [vmem:[#allocation7 + $0x110] sm:$0xff]
        %v993 = vld [vmem:[#allocation7 + $0x118] sm:$0xff]
        %v994 = vld [vmem:[#allocation7 + $0x120] sm:$0xff]
        %v995 = vld [vmem:[#allocation7 + $0x128] sm:$0xff]
        %v996 = vld [vmem:[#allocation7 + $0x130] sm:$0xff]
        %v997 = vld [vmem:[#allocation7 + $0x138] sm:$0xff]
        %v998 = vld [vmem:[#allocation7 + $0x140] sm:$0xff]
        %v999 = vld [vmem:[#allocation7 + $0x148] sm:$0xff]
        %v1000 = vld [vmem:[#allocation7 + $0x150] sm:$0xff]
        %v1001 = vld [vmem:[#allocation7 + $0x158] sm:$0xff]
        %v1002 = vld [vmem:[#allocation7 + $0x160] sm:$0xff]
        %v1003 = vld [vmem:[#allocation7 + $0x168] sm:$0xff]
        %v1004 = vld [vmem:[#allocation7 + $0x170] sm:$0xff]
        %v1005 = vld [vmem:[#allocation7 + $0x178] sm:$0xff]
        %v1006 = vld [vmem:[#allocation7 + $0x180] sm:$0xff]
        %v1007 = vld [vmem:[#allocation7 + $0x188] sm:$0xff]
        %v1008 = vld [vmem:[#allocation7 + $0x190] sm:$0xff]
        %v1009 = vld [vmem:[#allocation7 + $0x198] sm:$0xff]
        %v1010 = vld [vmem:[#allocation7 + $0x1a0] sm:$0xff]
        %v1011 = vld [vmem:[#allocation7 + $0x1a8] sm:$0xff]
        %v1012 = vld [vmem:[#allocation7 + $0x1b0] sm:$0xff]
        %v1013 = vld [vmem:[#allocation7 + $0x1b8] sm:$0xff]
        %v1014 = vld [vmem:[#allocation7 + $0x1c0] sm:$0xff]
        %v1015 = vld [vmem:[#allocation7 + $0x1c8] sm:$0xff]
        %v1016 = vld [vmem:[#allocation7 + $0x1d0] sm:$0xff]
        %v1017 = vld [vmem:[#allocation7 + $0x1d8] sm:$0xff]
        %v1018 = vld [vmem:[#allocation7 + $0x1e0] sm:$0xff]
        %v1019 = vld [vmem:[#allocation7 + $0x1e8] sm:$0xff]
        %v1020 = vld [vmem:[#allocation7 + $0x1f0] sm:$0xff]
        %v1021 = vld [vmem:[#allocation7 + $0x1f8] sm:$0xff]
        %1022 = vmatprep.subr.mxu0 0.0
        %1023 = vmatpush1.msra.mxu0 %v973
        %1024 = vmatprep.subr.mxu0 0.0
        %1025 = vmatpush1.msra.mxu0 %v972
        %1026 = vmatprep.subr.mxu0 0.0
        %1027 = vmatpush1.msra.mxu0 %v971
        %1028 = vmatprep.subr.mxu0 0.0
        %1029 = vmatpush1.msra.mxu0 %v970
        %1030 = vmatprep.subr.mxu0 0.0
        %1031 = vmatpush1.msra.mxu0 %v969
        %1032 = vmatprep.subr.mxu0 0.0
        %1033 = vmatpush1.msra.mxu0 %v968
        %1034 = vmatprep.subr.mxu0 0.0
        %1035 = vmatpush1.msra.mxu0 %v967
        %1036 = vmatprep.subr.mxu0 0.0
        %1037 = vmatpush1.msra.mxu0 %v966
        %1038 = vmatprep.subr.mxu0 0.0
        %1039 = vmatpush1.msra.mxu0 %v965
        %1040 = vmatprep.subr.mxu0 0.0
        %1041 = vmatpush1.msra.mxu0 %v964
        %1042 = vmatprep.subr.mxu0 0.0
        %1043 = vmatpush1.msra.mxu0 %v963
        %1044 = vmatprep.subr.mxu0 0.0
        %1045 = vmatpush1.msra.mxu0 %v962
        %1046 = vmatprep.subr.mxu0 0.0
        %1047 = vmatpush1.msra.mxu0 %v961
        %1048 = vmatprep.subr.mxu0 0.0
        %1049 = vmatpush1.msra.mxu0 %v960
        %1050 = vmatprep.subr.mxu0 0.0
        %1051 = vmatpush1.msra.mxu0 %v959
        %1052 = vmatprep.subr.mxu0 0.0
        %1053 = vmatpush1.msra.mxu0 %v958
        %1054 = vmatprep.subr.mxu0 0.0
        %1055 = vmatpush2.msra.mxu0 %v989
        %1056 = vmatprep.subr.mxu0 0.0
        %1057 = vmatpush2.msra.mxu0 %v988
        %1058 = vmatprep.subr.mxu0 0.0
        %1059 = vmatpush2.msra.mxu0 %v987
        %1060 = vmatprep.subr.mxu0 0.0
        %1061 = vmatpush2.msra.mxu0 %v986
        %1062 = vmatprep.subr.mxu0 0.0
        %1063 = vmatpush2.msra.mxu0 %v985
        %1064 = vmatprep.subr.mxu0 0.0
        %1065 = vmatpush2.msra.mxu0 %v984
        %1066 = vmatprep.subr.mxu0 0.0
        %1067 = vmatpush2.msra.mxu0 %v983
        %1068 = vmatprep.subr.mxu0 0.0
        %1069 = vmatpush2.msra.mxu0 %v982
        %1070 = vmatprep.subr.mxu0 0.0
        %1071 = vmatpush2.msra.mxu0 %v981
        %1072 = vmatprep.subr.mxu0 0.0
        %1073 = vmatpush2.msra.mxu0 %v980
        %1074 = vmatprep.subr.mxu0 0.0
        %1075 = vmatpush2.msra.mxu0 %v979
        %1076 = vmatprep.subr.mxu0 0.0
        %1077 = vmatpush2.msra.mxu0 %v978
        %1078 = vmatprep.subr.mxu0 0.0
        %1079 = vmatpush2.msra.mxu0 %v977
        %1080 = vmatprep.subr.mxu0 0.0
        %1081 = vmatpush2.msra.mxu0 %v976
        %1082 = vmatprep.subr.mxu0 0.0
        %1083 = vmatpush2.msra.mxu0 %v975
        %1084 = vmatprep.subr.mxu0 0.0
        %1085 = vmatpush2.msra.mxu0 %v974
        %1086 = vmatprep.mubr.f32.mxu0 %v919
        %1087 = vmatmul.mubr.f32.gmra.mxu0 %v918
        %v1088 = vpop.f32.mrf.mxu0
        %v1089 = vadd.f32 0.0, %v1088
        %v1090 = vpop.f32.mrf.mxu0
        %1091 = vmatprep.mubr.f32.mxu0 %v923
        %1092 = vmatmul.mubr.f32.gmra.mxu0 %v922
        %v1093 = vpop.f32.mrf.mxu0
        %v1094 = vadd.f32 0.0, %v1093
        %v1095 = vpop.f32.mrf.mxu0
        %1096 = vmatprep.mubr.f32.mxu0 %v927
        %1097 = vmatmul.mubr.f32.gmra.mxu0 %v926
        %v1098 = vpop.f32.mrf.mxu0
        %v1099 = vadd.f32 0.0, %v1098
        %v1100 = vpop.f32.mrf.mxu0
        %1101 = vmatprep.mubr.f32.mxu0 %v931
        %1102 = vmatmul.mubr.f32.gmra.mxu0 %v930
        %v1103 = vpop.f32.mrf.mxu0
        %v1104 = vadd.f32 0.0, %v1103
        %v1105 = vpop.f32.mrf.mxu0
        %1106 = vmatprep.mubr.f32.mxu0 %v935
        %1107 = vmatmul.mubr.f32.gmra.mxu0 %v934
        %v1108 = vpop.f32.mrf.mxu0
        %v1109 = vadd.f32 0.0, %v1108
        %v1110 = vpop.f32.mrf.mxu0
        %1111 = vmatprep.mubr.f32.mxu0 %v939
        %1112 = vmatmul.mubr.f32.gmra.mxu0 %v938
        %v1113 = vpop.f32.mrf.mxu0
        %v1114 = vadd.f32 0.0, %v1113
        %v1115 = vpop.f32.mrf.mxu0
        %1116 = vmatprep.mubr.f32.mxu0 %v943
        %1117 = vmatmul.mubr.f32.gmra.mxu0 %v942
        %v1118 = vpop.f32.mrf.mxu0
        %v1119 = vadd.f32 0.0, %v1118
        %v1120 = vpop.f32.mrf.mxu0
        %1121 = vmatprep.mubr.f32.mxu0 %v947
        %1122 = vmatmul.mubr.f32.gmra.mxu0 %v946
        %v1123 = vpop.f32.mrf.mxu0
        %v1124 = vadd.f32 0.0, %v1123
        %v1125 = vpop.f32.mrf.mxu0
        %1126 = vdwg.mxu0
        %1127 = vmatprep.subr.mxu0 0.0
        %1128 = vmatpush1.msra.mxu0 %v1005
        %1129 = vmatprep.subr.mxu0 0.0
        %1130 = vmatpush1.msra.mxu0 %v1004
        %1131 = vmatprep.subr.mxu0 0.0
        %1132 = vmatpush1.msra.mxu0 %v1003
        %1133 = vmatprep.subr.mxu0 0.0
        %1134 = vmatpush1.msra.mxu0 %v1002
        %1135 = vmatprep.subr.mxu0 0.0
        %1136 = vmatpush1.msra.mxu0 %v1001
        %1137 = vmatprep.subr.mxu0 0.0
        %1138 = vmatpush1.msra.mxu0 %v1000
        %1139 = vmatprep.subr.mxu0 0.0
        %1140 = vmatpush1.msra.mxu0 %v999
        %1141 = vmatprep.subr.mxu0 0.0
        %1142 = vmatpush1.msra.mxu0 %v998
        %1143 = vmatprep.subr.mxu0 0.0
        %1144 = vmatpush1.msra.mxu0 %v997
        %1145 = vmatprep.subr.mxu0 0.0
        %1146 = vmatpush1.msra.mxu0 %v996
        %1147 = vmatprep.subr.mxu0 0.0
        %1148 = vmatpush1.msra.mxu0 %v995
        %1149 = vmatprep.subr.mxu0 0.0
        %1150 = vmatpush1.msra.mxu0 %v994
        %1151 = vmatprep.subr.mxu0 0.0
        %1152 = vmatpush1.msra.mxu0 %v993
        %1153 = vmatprep.subr.mxu0 0.0
        %1154 = vmatpush1.msra.mxu0 %v992
        %1155 = vmatprep.subr.mxu0 0.0
        %1156 = vmatpush1.msra.mxu0 %v991
        %1157 = vmatprep.subr.mxu0 0.0
        %1158 = vmatpush1.msra.mxu0 %v990
        %1159 = vmatprep.subr.mxu0 0.0
        %1160 = vmatpush2.msra.mxu0 %v1021
        %1161 = vmatprep.subr.mxu0 0.0
        %1162 = vmatpush2.msra.mxu0 %v1020
        %1163 = vmatprep.subr.mxu0 0.0
        %1164 = vmatpush2.msra.mxu0 %v1019
        %1165 = vmatprep.subr.mxu0 0.0
        %1166 = vmatpush2.msra.mxu0 %v1018
        %1167 = vmatprep.subr.mxu0 0.0
        %1168 = vmatpush2.msra.mxu0 %v1017
        %1169 = vmatprep.subr.mxu0 0.0
        %1170 = vmatpush2.msra.mxu0 %v1016
        %1171 = vmatprep.subr.mxu0 0.0
        %1172 = vmatpush2.msra.mxu0 %v1015
        %1173 = vmatprep.subr.mxu0 0.0
        %1174 = vmatpush2.msra.mxu0 %v1014
        %1175 = vmatprep.subr.mxu0 0.0
        %1176 = vmatpush2.msra.mxu0 %v1013
        %1177 = vmatprep.subr.mxu0 0.0
        %1178 = vmatpush2.msra.mxu0 %v1012
        %1179 = vmatprep.subr.mxu0 0.0
        %1180 = vmatpush2.msra.mxu0 %v1011
        %1181 = vmatprep.subr.mxu0 0.0
        %1182 = vmatpush2.msra.mxu0 %v1010
        %1183 = vmatprep.subr.mxu0 0.0
        %1184 = vmatpush2.msra.mxu0 %v1009
        %1185 = vmatprep.subr.mxu0 0.0
        %1186 = vmatpush2.msra.mxu0 %v1008
        %1187 = vmatprep.subr.mxu0 0.0
        %1188 = vmatpush2.msra.mxu0 %v1007
        %1189 = vmatprep.subr.mxu0 0.0
        %1190 = vmatpush2.msra.mxu0 %v1006
        %1191 = vmatprep.mubr.f32.mxu0 %v921
        %1192 = vmatmul.mubr.f32.gmra.mxu0 %v920
        %v1193 = vpop.f32.mrf.mxu0
        %v1194 = vadd.f32 %v1089, %v1193
        %v1195 = vpop.f32.mrf.mxu0
        %1196 = vmatprep.mubr.f32.mxu0 %v925
        %1197 = vmatmul.mubr.f32.gmra.mxu0 %v924
        %v1198 = vpop.f32.mrf.mxu0
        %v1199 = vadd.f32 %v1094, %v1198
        %v1200 = vpop.f32.mrf.mxu0
        %1201 = vmatprep.mubr.f32.mxu0 %v929
        %1202 = vmatmul.mubr.f32.gmra.mxu0 %v928
        %v1203 = vpop.f32.mrf.mxu0
        %v1204 = vadd.f32 %v1099, %v1203
        %v1205 = vpop.f32.mrf.mxu0
        %1206 = vmatprep.mubr.f32.mxu0 %v933
        %1207 = vmatmul.mubr.f32.gmra.mxu0 %v932
        %v1208 = vpop.f32.mrf.mxu0
        %v1209 = vadd.f32 %v1104, %v1208
        %v1210 = vpop.f32.mrf.mxu0
        %1211 = vmatprep.mubr.f32.mxu0 %v937
        %1212 = vmatmul.mubr.f32.gmra.mxu0 %v936
        %v1213 = vpop.f32.mrf.mxu0
        %v1214 = vadd.f32 %v1109, %v1213
        %v1215 = vpop.f32.mrf.mxu0
        %1216 = vmatprep.mubr.f32.mxu0 %v941
        %1217 = vmatmul.mubr.f32.gmra.mxu0 %v940
        %v1218 = vpop.f32.mrf.mxu0
        %v1219 = vadd.f32 %v1114, %v1218
        %v1220 = vpop.f32.mrf.mxu0
        %1221 = vmatprep.mubr.f32.mxu0 %v945
        %1222 = vmatmul.mubr.f32.gmra.mxu0 %v944
        %v1223 = vpop.f32.mrf.mxu0
        %v1224 = vadd.f32 %v1119, %v1223
        %v1225 = vpop.f32.mrf.mxu0
        %1226 = vmatprep.mubr.f32.mxu0 %v949
        %1227 = vmatmul.mubr.f32.gmra.mxu0 %v948
        %v1228 = vpop.f32.mrf.mxu0
        %v1229 = vadd.f32 %v1124, %v1228
        %v1230 = vpop.f32.mrf.mxu0
        %1231 = vdwg.mxu0
        %v1232 = vadd.f32 %v950, %v1194
        %v1233 = vadd.f32 %v951, %v1199
        %v1234 = vadd.f32 %v952, %v1204
        %v1235 = vadd.f32 %v953, %v1209
        %v1236 = vadd.f32 %v954, %v1214
        %v1237 = vadd.f32 %v955, %v1219
        %v1238 = vadd.f32 %v956, %v1224
        %v1239 = vadd.f32 %v957, %v1229
        %1240 = vst [vmem:[%s313] sm:$0xff] %v1232
        %1241 = vst [vmem:[%s313 + $0x8] sm:$0xff] %v1233
        %1242 = vst [vmem:[%s313 + $0x10] sm:$0xff] %v1234
        %1243 = vst [vmem:[%s313 + $0x18] sm:$0xff] %v1235
        %1244 = vst [vmem:[%s313 + $0x20] sm:$0xff] %v1236
        %1245 = vst [vmem:[%s313 + $0x28] sm:$0xff] %v1237
        %1246 = vst [vmem:[%s313 + $0x30] sm:$0xff] %v1238
        %1247 = vst [vmem:[%s313 + $0x38] sm:$0xff] %v1239
        %s1248 = sand.u32 %s168, 1
        %s1249 = scalar_lea.sflag [#allocation4], %s1248
        %s1250 = sand.u32 %s168, 1
        %s1251 = smul.addr %s1250, 64
        %s1252 = scalar_lea.vmem [#allocation8], %s1251
        // Predicated region
        $region57: #{mlp_forward.1} parent=39 // pred_check
          %p1253 = pneg %p178
        $region58: #{mlp_forward.1} parent=39 // pred_check_branch
          %1255 = sbr.rel (%p1253) target = $region60
        $region59: #{mlp_forward.1} parent=39 // pred_region
          %s1256 = smul.u32 8, %s27
          %s1258 = ssub.s32 1024, 1024
          %1259 = vsyncadd %s1249, %s1258
          %s1260 = smul.addr %s1256, 128
          %s1261 = scalar_lea.hbm %s5, %s1260
          %s1262 = sshll.u32 %s1252, 4
          %s1263 = int_to_ptr.vmem [resolvable:$true] %s1262
          %1268 = dma.vmem_to_hbm [thread:$0]  %s1263, 1024, %s1261, %s1249, 128, 128, 8
        $region60: #{mlp_forward.1} parent=39 // pred_fallthru
          _
      $region40: #{mlp_forward.1} parent=5 // pred_fallthru
        _
      %p1269 = scmp.le.s32.totalorder 2, %s18
      // Predicated region
      $region61: #{mlp_forward.1} parent=5 // pred_check
        %p1270 = pneg %p1269
      $region62: #{mlp_forward.1} parent=5 // pred_check_branch
        %1272 = sbr.rel (%p1270) target = $region64
      $region63: #{mlp_forward.1} parent=5 // pred_region
        %s1273 = ssub.s32 %s18, 2
        // Predicated region
        $region65: #{mlp_forward.1} parent=63 // pred_check
          %p1274 = pneg %p184
        $region66: #{mlp_forward.1} parent=63 // pred_check_branch
          %1276 = sbr.rel (%p1274) target = $region68
        $region67: #{mlp_forward.1} parent=63 // pred_region
          %s1277 = sand.u32 %s169, 1
          %s1278 = scalar_lea.sflag [#allocation4], %s1277
          %s1279 = sand.u32 %s169, 1
          %s1280 = smul.addr %s1279, 64
          %s1281 = scalar_lea.vmem [#allocation8], %s1280
          %1282 = dma.done %s1278, 1024
        $region68: #{mlp_forward.1} parent=63 // pred_fallthru
          _
      $region64: #{mlp_forward.1} parent=5 // pred_fallthru
        _
    $region6: #{mlp_forward.1} parent=1 // loop_footer
      %s22 = sadd.s32 1, %s18
    $region7: #{mlp_forward.1} parent=1 // loop_footer_branch
      %17 = sbr.rel target = $region3
    $region8: #{mlp_forward.1} parent=1 // loop_exit
      _
    %1283 = vsyncpa [#allocation3], 1
    %s1284 = scalar_lea.sflag [#allocation3], 1
    %1285 = vsyncpa %s1284, 1
    %1286 = vsyncpa [#allocation6], 1
    %1287 = vsyncpa [#allocation4], 1
    %s1288 = scalar_lea.sflag [#allocation4], 1
    %1289 = vsyncpa %s1288, 1

</llo_original>
